<compile_context>
chip_gen: v7x
topology: tpu7x:2x2x1
jax: 0.10.0
libtpu: 0.0.40
codegen_flags: <defaults>
</compile_context>

<pallas_src>
import functools

import jax
import jax.numpy as jnp
from jax.experimental import pallas as pl
from jax.experimental.pallas import tpu as pltpu

_LANE = 128
_TN_MAX = 2048                       # lane-tile sweet spot for mem-bound kernels
_SMALL_BYTES = 1 << 20               # below this, use the fused-able jnp path
_GAMMA_RESIDENT_BYTES = 2 * 1024 * 1024  # max VMEM (double-buffered) for resident gamma


def _vmem_budget():
    """Return (per-tile byte cap, vmem_limit_bytes) sized to this chip's VMEM."""
    try:
        cap = int(pltpu.get_tpu_info().vmem_capacity_bytes)
        if cap <= 0:
            raise ValueError
    except Exception:
        cap = 64 * 1024 * 1024        # v7x per-TC physical; safe everywhere
    vmem_limit = min((3 * cap) // 4, 96 * 1024 * 1024)
    # 2x in + 2x out double-buffered tiles + gamma + compiler scratch slack.
    tile_bytes = vmem_limit // 6
    return tile_bytes, vmem_limit


def _scale_kernel_tiled(g_ref, x_ref, o_ref):
    # g_ref: (tr, 1); x_ref / o_ref: (tr, tn).  (tr,1)*(tr,tn) lane-broadcasts gamma.
    o_ref[...] = (g_ref[...] * x_ref[...]).astype(o_ref.dtype)


def _scale_kernel_resident(g_ref, x_ref, o_ref, *, tr: int):
    # g_ref: full (R_pad, 1) column, resident across the whole grid; slice our rows.
    start = pl.program_id(0) * tr
    if tr % 8 == 0:
        start = pl.multiple_of(start, 8)
    g = g_ref[pl.ds(start, tr), :]
    o_ref[...] = (g * x_ref[...]).astype(o_ref.dtype)


def layer_scaler(x: jax.Array, gamma: jax.Array, *,
                 force_pallas: bool = False, donate_x: bool = False) -> jax.Array:
    """y[b, c, n] = gamma[c] * x[b, c, n]  (PyTorch: gamma[None, ..., None] * x)."""
    assert x.ndim == 3, "LayerScaler kernel expects x of shape (B, C, N)"
    B, C, N = x.shape
    assert gamma.shape == (C,)

    itemsize = jnp.dtype(x.dtype).itemsize
    # Keep bf16 packed on v6e/v7x; promote everything else (ints, fp8, ...) to f32.
    gdtype = x.dtype if x.dtype in (jnp.float32, jnp.bfloat16) else jnp.float32

    # --- tiny-input fast path: let XLA fuse the broadcast-multiply ----------------
    if not force_pallas and x.size * itemsize <= _SMALL_BYTES:
        return (gamma[None, :, None].astype(gdtype) * x).astype(x.dtype)

    R = B * C
    x2d = x.reshape(R, N)             # free reshape: leading dims are contiguous

    # --- lane tile: full extent if small, else an even split in multiples of 128 --
    if N <= _TN_MAX:
        tn = N
    else:
        n_splits = pl.cdiv(N, _TN_MAX)
        tn = pl.cdiv(pl.cdiv(N, n_splits), _LANE) * _LANE

    # --- row tile: multiple of the packed-sublane quantum, within the byte budget -
    tile_bytes_max, vmem_limit = _vmem_budget()
    sub = 8 * max(1, 4 // itemsize)   # 8 (f32), 16 (bf16), 32 (int8/fp8)
    max_rows = max(sub, (tile_bytes_max // (tn * itemsize)) // sub * sub)
    tr = R if R <= max_rows else max_rows

    grid = (pl.cdiv(R, tr), pl.cdiv(N, tn))
    r_pad = grid[0] * tr              # gamma padded so manual slices never go OOB

    # One gamma value per folded row: row r = b*C + c -> gamma[c].
    g_col = jnp.tile(gamma.reshape(C, 1).astype(gdtype), (B, 1))
    if r_pad != R:
        g_col = jnp.pad(g_col, ((0, r_pad - R), (0, 0)))

    g_item = jnp.dtype(gdtype).itemsize
    # (r_pad, 1) pads to (r_pad, 128) in VMEM; double-buffered -> keep it small.
    resident = (r_pad * 128 * g_item * 2) <= _GAMMA_RESIDENT_BYTES

    if resident:
        kernel = functools.partial(_scale_kernel_resident, tr=tr)
        g_spec = pl.BlockSpec((r_pad, 1), lambda r, n: (0, 0))   # loaded once, stays put
    else:
        kernel = _scale_kernel_tiled
        g_spec = pl.BlockSpec((tr, 1), lambda r, n: (r, 0))      # re-DMAd per row tile

    out2d = pl.pallas_call(
        kernel,
        out_shape=jax.ShapeDtypeStruct((R, N), x.dtype),
        grid_spec=pltpu.PrefetchScalarGridSpec(
            num_scalar_prefetch=0,
            grid=grid,
            in_specs=[
                g_spec,
                pl.BlockSpec((tr, tn), lambda r, n: (r, n)),     # lane-dense x tile
            ],
            out_specs=pl.BlockSpec((tr, tn), lambda r, n: (r, n)),
        ),
        compiler_params=pltpu.CompilerParams(
            dimension_semantics=("parallel", "parallel"),
            vmem_limit_bytes=vmem_limit,
        ),
        # Only alias when the caller guarantees x is dead after this op.
        input_output_aliases=({1: 0} if donate_x else {}),
    )(g_col, x2d)

    return out2d.reshape(B, C, N)


if __name__ == "__main__":
    key = jax.random.PRNGKey(0)
    init_value = 1e-2
    k1, k2, k3, k4 = jax.random.split(key, 4)

    # Case 1: the module's natural small shape (2, 4, 128) f32 -> jnp fast path.
    B, C, N = 2, 4, 128
    gamma = init_value * jnp.ones((C,), dtype=jnp.float32)
    x = jax.random.normal(k1, (B, C, N), dtype=jnp.float32)
    y = jax.block_until_ready(layer_scaler(x, gamma))
    assert y.shape == x.shape
    assert jnp.allclose(y, gamma[None, :, None] * x, atol=1e-6, rtol=1e-6)

    # Case 2: force the Pallas path on a small ragged shape (rows not a multiple of 8,
    # N=2200 split into two balanced 1152-lane tiles; resident-gamma kernel).
    B2, C2, N2 = 3, 5, 2200
    gamma2 = init_value * jnp.ones((C2,), dtype=jnp.float32)
    x2 = jax.random.normal(k2, (B2, C2, N2), dtype=jnp.float32)
    y2 = jax.block_until_ready(layer_scaler(x2, gamma2, force_pallas=True))
    assert y2.shape == x2.shape
    assert jnp.allclose(y2, gamma2[None, :, None] * x2, atol=1e-6, rtol=1e-6)

    # Case 3: bf16 input large enough to take the Pallas path automatically
    # (packed bf16 multiply, resident gamma, two lane tiles).
    B3, C3, N3 = 8, 96, 3000
    gamma3 = init_value * jnp.ones((C3,), dtype=jnp.float32)
    x3 = jax.random.normal(k3, (B3, C3, N3), dtype=jnp.bfloat16)
    y3 = jax.block_until_ready(layer_scaler(x3, gamma3))
    assert y3.dtype == x3.dtype and y3.shape == x3.shape
    ref3 = gamma3[None, :, None] * x3.astype(jnp.float32)
    assert jnp.allclose(y3.astype(jnp.float32), ref3, atol=1e-3, rtol=2e-2)

    # Case 4: many folded rows -> exercises the per-row-tile gamma fallback.
    B4, C4, N4 = 4, 768, 1024
    gamma4 = init_value * jnp.ones((C4,), dtype=jnp.float32)
    x4 = jax.random.normal(k4, (B4, C4, N4), dtype=jnp.float32)
    y4 = jax.block_until_ready(layer_scaler(x4, gamma4))
    assert y4.shape == x4.shape
    assert jnp.allclose(y4, gamma4[None, :, None] * x4, atol=1e-6, rtol=1e-6)

    print("KERNEL_OK")
</pallas_src>

<mosaic_0001>
module attributes {stable_mosaic.version = 11 : i64} {
  func.func @_scale_kernel_resident(%arg0: i32, %arg1: i32, %arg2: memref<15x1xf32, #tpu.memory_space<vmem>>, %arg3: memref<15x1152xf32, #tpu.memory_space<vmem>>, %arg4: memref<15x1152xf32, #tpu.memory_space<vmem>>) attributes {dimension_semantics = [#tpu.dimension_semantics<parallel>, #tpu.dimension_semantics<parallel>], iteration_bounds = array<i64: 1, 2>, scalar_prefetch = 0 : i64, scratch_operands = 0 : i64, tpu.core_type = #tpu.core_type<tc>, window_params = [{pipeline_mode = #tpu.pipeline_mode<synchronous>, transform_indices = @transform_0, window_bounds = array<i64: 15, 1>}, {transform_indices = @transform_1, window_bounds = array<i64: 15, 1152>}, {transform_indices = @transform_2, window_bounds = array<i64: 15, 1152>}]} {
    %c15_i32 = arith.constant 15 : i32
    %0 = arith.muli %arg0, %c15_i32 : i32
    %1 = arith.index_cast %0 : i32 to index
    %c0 = arith.constant 0 : index
    %2 = vector.load %arg2[%1, %c0] : memref<15x1xf32, #tpu.memory_space<vmem>>, vector<15x1xf32>
    %c0_0 = arith.constant 0 : index
    %c0_1 = arith.constant 0 : index
    %3 = vector.load %arg3[%c0_0, %c0_1] : memref<15x1152xf32, #tpu.memory_space<vmem>>, vector<15x1152xf32>
    %4 = vector.broadcast %2 : vector<15x1xf32> to vector<15x1152xf32>
    %5 = arith.mulf %4, %3 : vector<15x1152xf32>
    %c0_2 = arith.constant 0 : index
    %c0_3 = arith.constant 0 : index
    %6 = vector.load %arg4[%c0_2, %c0_3] : memref<15x1152xf32, #tpu.memory_space<vmem>>, vector<15x1152xf32>
    tpu.vector_store %arg4[%c0_2, %c0_3], %5 {strides = array<i32>} : memref<15x1152xf32, #tpu.memory_space<vmem>>, vector<15x1152xf32>,
    return
  }
  func.func @transform_0(%arg0: i32, %arg1: i32) -> (i32, i32) {
    %c0_i32 = arith.constant 0 : i32
    %c0_i32_0 = arith.constant 0 : i32
    %c0_i32_1 = arith.constant 0 : i32
    return %c0_i32, %c0_i32_0 : i32, i32
  }
  func.func @transform_1(%arg0: i32, %arg1: i32) -> (i32, i32) {
    %c0_i32 = arith.constant 0 : i32
    return %arg0, %arg1 : i32, i32
  }
  func.func @transform_2(%arg0: i32, %arg1: i32) -> (i32, i32) {
    %c0_i32 = arith.constant 0 : i32
    return %arg0, %arg1 : i32, i32
  }
}

</mosaic_0001>

<llo_original>
// kernel: tpu_custom_call.1
$region0: #{tpu_custom_call.1}
  #allocation0 [shape = 'u32[]', space=smem, size = 0x4, offset = 0x4, fixed_abs, tag = 'smem constant byte address 0x4 - core index']
  #allocation1 [shape = 'u32[144,128]{1,0:T(1,128)}', space=vmem, size = 0x12000, scoped, tag = 'internal scratch']
  %s0 = inlined_call_operand.vmem [shape: f32[15,1], index: 0, kind: input, shape index: {}]
  %s1 = inlined_call_operand.hbm [shape: f32[15,2200], index: 1, kind: input, shape index: {}]
  %s2 = inlined_call_operand.hbm [shape: f32[15,2200], index: 2, kind: output, shape index: {}]
  %s3 = sld [smem:[#allocation0]]
  $region45: #{tpu_custom_call.1} parent=0
    _
  %s5 = ssub.s32 1, %s3
  %s6 = scalar_select 0, %s5, %s3
  $region1: #{tpu_custom_call.1} parent=0
    #allocation2 [shape = 'u8[147456]{0}', space=vmem, size = 0x24000, scoped, tag = 'input window, operand 1']
    #allocation3 [shape = 's32[2]{0}', space=sflag, size = 0x8, scoped, tag = 'scoped memory for tpu_custom_call.1']
    #allocation4 [shape = 's32[2]{0}', space=sflag, size = 0x8, scoped, tag = 'scoped memory for tpu_custom_call.1']
    #allocation5 [shape = 'u8[147456]{0}', space=vmem, size = 0x24000, scoped, tag = 'output window, operand 0']
    %7 = vsyncpa [#allocation3], 0
    %s8 = scalar_lea.sflag [#allocation3], 1
    %9 = vsyncpa %s8, 0
    %10 = vsyncpa [#allocation4], 0
    %s11 = scalar_lea.sflag [#allocation4], 1
    %12 = vsyncpa %s11, 0
    loop: start=0, step=1, limit=4
    $region2: #{tpu_custom_call.1} parent=1 // loop_pre_header
      _
    $region3: #{tpu_custom_call.1} parent=1 // loop_header
      %s14 = sphi 0, %s18
      %p15 = scmp.ge.s32.totalorder %s14, 4
      %s21 = sphi 0, %s33
      %s22 = sphi 0, %s29
      %s23 = sphi 0, %s21
      %s24 = sphi 0, %s22
      %s25 = sphi 0, %s23
      %s26 = sphi 0, %s24
      %s34 = sphi 0, %s34
      %s36 = sphi 0, %s34
      %s37 = sphi 0, %s36
      %s51 = sphi 0, %s37
      %s59 = sphi 0, %s61
      %s62 = sphi 0, %s59
      %s63 = sphi 0, %s62
      %s79 = sphi 0, %s63
      %s87 = sphi 0, %s89
      %s90 = sphi 0, %s87
      %s91 = sphi 0, %s90
      %s107 = sphi 0, %s91
    $region4: #{tpu_custom_call.1} parent=1 // loop_header_branch
      %17 = sbr.rel (%p15) target = $region8
    $region5: #{tpu_custom_call.1} parent=1 // loop_body
      %s19 = ssub.s32 %s14, 1
      %s20 = ssub.s32 %s14, 2
      %s27 = sadd.s32 1, %s22
      %p28 = scmp.ge.s32.totalorder %s27, 2
      %s29 = scalar_select %p28, 0, %s27
      %s30 = sadd.s32 1, %s21
      %s31 = scalar_select %p28, %s30, %s21
      %p32 = scmp.ge.s32.totalorder %s31, 1
      %s33 = scalar_select %p32, 0, %s31
      %s35 = sadd.s32 %s34, 1
      %p38 = scmp.eq.s32.totalorder %s14, 1
      %p39 = scmp.ne.s32.totalorder %s34, %s36
      %p40 = scmp.eq.s32.totalorder %s14, 0
      %p41 = por %p39, %p40
      %p42 = scmp.ne.s32.totalorder %s34, %s36
      %p43 = scmp.eq.s32.totalorder %s19, 1
      %p44 = por %p42, %p43
      %p45 = scmp.ne.s32.totalorder %s36, %s37
      %p46 = scmp.eq.s32.totalorder %s19, 0
      %p47 = por %p45, %p46
      %p48 = scmp.ne.s32.totalorder %s36, %s37
      %p49 = scmp.eq.s32.totalorder %s20, 1
      %p50 = por %p48, %p49
      %p52 = scmp.ne.s32.totalorder %s37, %s51
      %p53 = scmp.eq.s32.totalorder %s20, 0
      %p54 = por %p52, %p53
      %s55 = ssub.s32 %s21, %s33
      %s56 = ssub.s32 %s22, %s29
      %s57 = sor.u32 %s55, %s56
      %p58 = scmp.eq.s32.totalorder %s57, 0
      %s60 = sadd.s32 %s59, 1
      %s61 = scalar_select %p58, %s59, %s60
      %p64 = pneg %p58
      %p65 = scmp.eq.s32.totalorder %s14, 1
      %p66 = por %p64, %p65
      %p67 = scmp.ne.s32.totalorder %s59, %s62
      %p68 = scmp.eq.s32.totalorder %s14, 0
      %p69 = por %p67, %p68
      %p70 = scmp.ne.s32.totalorder %s59, %s62
      %p71 = scmp.eq.s32.totalorder %s19, 1
      %p72 = por %p70, %p71
      %p73 = scmp.ne.s32.totalorder %s62, %s63
      %p74 = scmp.eq.s32.totalorder %s19, 0
      %p75 = por %p73, %p74
      %p76 = scmp.ne.s32.totalorder %s62, %s63
      %p77 = scmp.eq.s32.totalorder %s20, 1
      %p78 = por %p76, %p77
      %p80 = scmp.ne.s32.totalorder %s63, %s79
      %p81 = scmp.eq.s32.totalorder %s20, 0
      %p82 = por %p80, %p81
      %s83 = ssub.s32 %s21, %s33
      %s84 = ssub.s32 %s22, %s29
      %s85 = sor.u32 %s83, %s84
      %p86 = scmp.eq.s32.totalorder %s85, 0
      %s88 = sadd.s32 %s87, 1
      %s89 = scalar_select %p86, %s87, %s88
      %p92 = pneg %p86
      %p93 = scmp.eq.s32.totalorder %s14, 1
      %p94 = por %p92, %p93
      %p95 = scmp.ne.s32.totalorder %s87, %s90
      %p96 = scmp.eq.s32.totalorder %s14, 0
      %p97 = por %p95, %p96
      %p98 = scmp.ne.s32.totalorder %s87, %s90
      %p99 = scmp.eq.s32.totalorder %s19, 1
      %p100 = por %p98, %p99
      %p101 = scmp.ne.s32.totalorder %s90, %s91
      %p102 = scmp.eq.s32.totalorder %s19, 0
      %p103 = por %p101, %p102
      %p104 = scmp.ne.s32.totalorder %s90, %s91
      %p105 = scmp.eq.s32.totalorder %s20, 1
      %p106 = por %p104, %p105
      %p108 = scmp.ne.s32.totalorder %s91, %s107
      %p109 = scmp.eq.s32.totalorder %s20, 0
      %p110 = por %p108, %p109
      %p111 = scmp.le.s32.totalorder 1, %s14
      %p112 = scmp.lt.s32.totalorder %s14, 3
      %p113 = pnand %p111, %p112
      %p114 = pneg %p113
      // Predicated region
      $region9: #{tpu_custom_call.1} parent=5 // pred_check
        _
      $region10: #{tpu_custom_call.1} parent=5 // pred_check_branch
        %116 = sbr.rel (%p113) target = $region12
      $region11: #{tpu_custom_call.1} parent=5 // pred_region
        %s117 = ssub.s32 %s14, 1
        // Predicated region
        $region13: #{tpu_custom_call.1} parent=11 // pred_check
          %p118 = pneg %p47
        $region14: #{tpu_custom_call.1} parent=11 // pred_check_branch
          %120 = sbr.rel (%p118) target = $region16
        $region15: #{tpu_custom_call.1} parent=11 // pred_region
          _
        $region16: #{tpu_custom_call.1} parent=11 // pred_fallthru
          _
      $region12: #{tpu_custom_call.1} parent=5 // pred_fallthru
        _
      %p121 = scmp.lt.s32.totalorder %s14, 2
      // Predicated region
      $region17: #{tpu_custom_call.1} parent=5 // pred_check
        %p122 = pneg %p121
      $region18: #{tpu_custom_call.1} parent=5 // pred_check_branch
        %124 = sbr.rel (%p122) target = $region20
      $region19: #{tpu_custom_call.1} parent=5 // pred_region
        // Predicated region
        $region21: #{tpu_custom_call.1} parent=19 // pred_check
          %p125 = pneg %p69
        $region22: #{tpu_custom_call.1} parent=19 // pred_check_branch
          %127 = sbr.rel (%p125) target = $region24
        $region23: #{tpu_custom_call.1} parent=19 // pred_region
          %s128 = sand.u32 %s59, 1
          %s129 = scalar_lea.sflag [#allocation3], %s128
          %s130 = sand.u32 %s59, 1
          %s131 = smul.addr %s130, 144
          %s132 = scalar_lea.vmem [#allocation2], %s131
          %s133 = smul.u32 2, %s21
          %s134 = smul.u32 9, %s22
          %s136 = ssub.s32 2304, 2304
          %137 = vsyncadd %s129, %s136
          %s138 = smul.addr %s133, 18
          %s139 = sadd.s32 %s134, %s138
          %s140 = smul.addr %s139, 128
          %s141 = scalar_lea.hbm %s1, %s140
          %s142 = sshll.u32 %s132, 4
          %s143 = int_to_ptr.vmem [resolvable:$true] %s142
          %148 = dma.hbm_to_vmem [thread:$0]  %s141, 2304, %s143, %s129, 2304, 1152, 72
        $region24: #{tpu_custom_call.1} parent=19 // pred_fallthru
          _
      $region20: #{tpu_custom_call.1} parent=5 // pred_fallthru
        _
      %p149 = scmp.le.s32.totalorder 1, %s14
      %p150 = scmp.lt.s32.totalorder %s14, 3
      %p151 = pnand %p149, %p150
      %p152 = pneg %p151
      // Predicated region
      $region25: #{tpu_custom_call.1} parent=5 // pred_check
        _
      $region26: #{tpu_custom_call.1} parent=5 // pred_check_branch
        %154 = sbr.rel (%p151) target = $region28
      $region27: #{tpu_custom_call.1} parent=5 // pred_region
        %s155 = ssub.s32 %s14, 1
        %s156 = sand.u32 %s62, 1
        %s157 = scalar_lea.sflag [#allocation3], %s156
        %s158 = sand.u32 %s62, 1
        %s159 = smul.addr %s158, 144
        %s160 = scalar_lea.vmem [#allocation2], %s159
        // Predicated region
        $region29: #{tpu_custom_call.1} parent=27 // pred_check
          %p161 = pneg %p75
        $region30: #{tpu_custom_call.1} parent=27 // pred_check_branch
          %163 = sbr.rel (%p161) target = $region32
        $region31: #{tpu_custom_call.1} parent=27 // pred_region
          %164 = dma.done %s157, 2304
        $region32: #{tpu_custom_call.1} parent=27 // pred_fallthru
          _
        %p165 = pneg %p47
        %p166 = pneg %p44
        %s167 = sand.u32 %s62, 1
        %s168 = scalar_lea.sflag [#allocation3], %s167
        %s169 = sand.u32 %s62, 1
        %s170 = smul.addr %s169, 144
        %s171 = scalar_lea.vmem [#allocation2], %s170
        %p172 = pneg %p75
        %p173 = pneg %p72
        %p174 = pneg %p103
        %p175 = pneg %p100
        %s176 = sand.u32 %s90, 1
        %s177 = scalar_lea.sflag [#allocation4], %s176
        %s178 = sand.u32 %s90, 1
        %s179 = smul.addr %s178, 144
        %s180 = scalar_lea.vmem [#allocation5], %s179
        %s181 = smul.u32 2, %s23
        %s182 = smul.u32 9, %s24
        %s183 = smul.u32 2, %s23
        %s184 = smul.u32 9, %s24
        %s185 = smul.u32 %s23, 15
        %s186 = scalar_lea.vmem %s0, %s185
        %v187 = vld [vmem:[%s186] sm:$0xff]
        %v188 = vld [vmem:[%s186 + $0x8] sm:$0x7f]
        %v189 = vld [vmem:[%s160] sm:$0xff]
        %v190 = vld [vmem:[%s160 + $0x8] sm:$0xff]
        %v191 = vld [vmem:[%s160 + $0x10] sm:$0xff]
        %v192 = vld [vmem:[%s160 + $0x18] sm:$0xff]
        %v193 = vld [vmem:[%s160 + $0x20] sm:$0xff]
        %v194 = vld [vmem:[%s160 + $0x28] sm:$0xff]
        %v195 = vld [vmem:[%s160 + $0x30] sm:$0xff]
        %v196 = vld [vmem:[%s160 + $0x38] sm:$0xff]
        %v197 = vld [vmem:[%s160 + $0x40] sm:$0xff]
        %v198 = vld [vmem:[%s160 + $0x48] sm:$0x7f]
        %v199 = vld [vmem:[%s160 + $0x50] sm:$0x7f]
        %v200 = vld [vmem:[%s160 + $0x58] sm:$0x7f]
        %v201 = vld [vmem:[%s160 + $0x60] sm:$0x7f]
        %v202 = vld [vmem:[%s160 + $0x68] sm:$0x7f]
        %v203 = vld [vmem:[%s160 + $0x70] sm:$0x7f]
        %v204 = vld [vmem:[%s160 + $0x78] sm:$0x7f]
        %v205 = vld [vmem:[%s160 + $0x80] sm:$0x7f]
        %v206 = vld [vmem:[%s160 + $0x88] sm:$0x7f]
        %208 = vset.pattern.permute.xlu0 0
        %209 = vperm.xlu0 %208, %v187
        %v210 = vpop.permute.xlu0 %209
        %213 = vset.pattern.permute.xlu0 0
        %214 = vperm.xlu0 %213, %v188
        %v215 = vpop.permute.xlu0 %214
        %v217 = vmul.f32 %v210, %v189
        %v218 = vmul.f32 %v210, %v190
        %v219 = vmul.f32 %v210, %v191
        %v220 = vmul.f32 %v210, %v192
        %v221 = vmul.f32 %v210, %v193
        %v222 = vmul.f32 %v210, %v194
        %v223 = vmul.f32 %v210, %v195
        %v224 = vmul.f32 %v210, %v196
        %v225 = vmul.f32 %v210, %v197
        %v226 = vmul.f32 %v215, %v198
        %v227 = vmul.f32 %v215, %v199
        %v228 = vmul.f32 %v215, %v200
        %v229 = vmul.f32 %v215, %v201
        %v230 = vmul.f32 %v215, %v202
        %v231 = vmul.f32 %v215, %v203
        %v232 = vmul.f32 %v215, %v204
        %v233 = vmul.f32 %v215, %v205
        %v234 = vmul.f32 %v215, %v206
        %235 = vst [vmem:[%s180] sm:$0xff] %v217
        %236 = vst [vmem:[%s180 + $0x8] sm:$0xff] %v218
        %237 = vst [vmem:[%s180 + $0x10] sm:$0xff] %v219
        %238 = vst [vmem:[%s180 + $0x18] sm:$0xff] %v220
        %239 = vst [vmem:[%s180 + $0x20] sm:$0xff] %v221
        %240 = vst [vmem:[%s180 + $0x28] sm:$0xff] %v222
        %241 = vst [vmem:[%s180 + $0x30] sm:$0xff] %v223
        %242 = vst [vmem:[%s180 + $0x38] sm:$0xff] %v224
        %243 = vst [vmem:[%s180 + $0x40] sm:$0xff] %v225
        %244 = vst [vmem:[%s180 + $0x48] sm:$0x7f] %v226
        %245 = vst [vmem:[%s180 + $0x50] sm:$0x7f] %v227
        %246 = vst [vmem:[%s180 + $0x58] sm:$0x7f] %v228
        %247 = vst [vmem:[%s180 + $0x60] sm:$0x7f] %v229
        %248 = vst [vmem:[%s180 + $0x68] sm:$0x7f] %v230
        %249 = vst [vmem:[%s180 + $0x70] sm:$0x7f] %v231
        %250 = vst [vmem:[%s180 + $0x78] sm:$0x7f] %v232
        %251 = vst [vmem:[%s180 + $0x80] sm:$0x7f] %v233
        %252 = vst [vmem:[%s180 + $0x88] sm:$0x7f] %v234
        %s253 = sand.u32 %s90, 1
        %s254 = scalar_lea.sflag [#allocation4], %s253
        %s255 = sand.u32 %s90, 1
        %s256 = smul.addr %s255, 144
        %s257 = scalar_lea.vmem [#allocation5], %s256
        // Predicated region
        $region33: #{tpu_custom_call.1} parent=27 // pred_check
          %p258 = pneg %p100
        $region34: #{tpu_custom_call.1} parent=27 // pred_check_branch
          %260 = sbr.rel (%p258) target = $region36
        $region35: #{tpu_custom_call.1} parent=27 // pred_region
          %s261 = smul.u32 2, %s23
          %s262 = smul.u32 9, %s24
          %s264 = ssub.s32 2304, 2304
          %265 = vsyncadd %s254, %s264
          %s266 = smul.addr %s261, 18
          %s267 = sadd.s32 %s262, %s266
          %s268 = smul.addr %s267, 128
          %s269 = scalar_lea.hbm %s2, %s268
          %s270 = sshll.u32 %s257, 4
          %s271 = int_to_ptr.vmem [resolvable:$true] %s270
          %276 = dma.vmem_to_hbm [thread:$0]  %s271, 2304, %s269, %s254, 1152, 2304, 72
        $region36: #{tpu_custom_call.1} parent=27 // pred_fallthru
          _
      $region28: #{tpu_custom_call.1} parent=5 // pred_fallthru
        _
      %p277 = scmp.le.s32.totalorder 2, %s14
      // Predicated region
      $region37: #{tpu_custom_call.1} parent=5 // pred_check
        %p278 = pneg %p277
      $region38: #{tpu_custom_call.1} parent=5 // pred_check_branch
        %280 = sbr.rel (%p278) target = $region40
      $region39: #{tpu_custom_call.1} parent=5 // pred_region
        %s281 = ssub.s32 %s14, 2
        // Predicated region
        $region41: #{tpu_custom_call.1} parent=39 // pred_check
          %p282 = pneg %p106
        $region42: #{tpu_custom_call.1} parent=39 // pred_check_branch
          %284 = sbr.rel (%p282) target = $region44
        $region43: #{tpu_custom_call.1} parent=39 // pred_region
          %s285 = sand.u32 %s91, 1
          %s286 = scalar_lea.sflag [#allocation4], %s285
          %s287 = sand.u32 %s91, 1
          %s288 = smul.addr %s287, 144
          %s289 = scalar_lea.vmem [#allocation5], %s288
          %290 = dma.done %s286, 2304
        $region44: #{tpu_custom_call.1} parent=39 // pred_fallthru
          _
      $region40: #{tpu_custom_call.1} parent=5 // pred_fallthru
        _
    $region6: #{tpu_custom_call.1} parent=1 // loop_footer
      %s18 = sadd.s32 1, %s14
    $region7: #{tpu_custom_call.1} parent=1 // loop_footer_branch
      %13 = sbr.rel target = $region3
    $region8: #{tpu_custom_call.1} parent=1 // loop_exit
      _
    %291 = vsyncpa [#allocation3], 1
    %s292 = scalar_lea.sflag [#allocation3], 1
    %293 = vsyncpa %s292, 1
    %294 = vsyncpa [#allocation4], 1
    %s295 = scalar_lea.sflag [#allocation4], 1
    %296 = vsyncpa %s295, 1

</llo_original>
